<compile_context>
chip_gen: v6e
topology: v6e:2x2x1
jax: 0.10.0
libtpu: 0.0.40
codegen_flags: <defaults>
</compile_context>

<pallas_src>
import jax
import jax.numpy as jnp
from jax.experimental import pallas as pl
from jax.experimental.pallas import tpu as pltpu


def _round_up(x, m):
    return ((x + m - 1) // m) * m


def _pick_tb(B, batch_tile):
    """Batch tile: >=2 grid steps for B>8, multiple of 8, 128-aligned if big."""
    batch_tile = _round_up(max(batch_tile, 8), 8)   # defensive (8,128) rule
    if B <= 8:
        return B                                     # full-extent block
    tb = _round_up(pl.cdiv(B, 4), 8)                 # target ~4 grid steps
    tb = min(tb, batch_tile)
    if tb >= 128:
        tb = (tb // 128) * 128                       # v5e: MXU-friendly tiles
    return max(tb, 8)


def _pick_nsub(tb):
    """Row sub-blocks per tile for MXU/EUP overlap (sub rows must be 8-aligned)."""
    for ns in (4, 2):
        if tb % ns == 0 and (tb // ns) % 8 == 0 and (tb // ns) >= 8:
            return ns
    return 1


def _make_head_kernel(nsub, sub_rows):
    def _head_kernel(x_ref, w1_ref, b1_ref, w2_ref, b2_ref, o_ref):
        # x_ref : [tb, D]   CLS-token features for this batch tile
        # w1_ref: [D, H]  bf16       b1_ref: [1, H]   f32
        # w2_ref: [H, Cp] bf16       b2_ref: [1, Cp]  f32 (lane-padded)
        # o_ref : [tb, Cp] f32
        w1 = w1_ref[...]
        b1 = b1_ref[...]
        w2 = w2_ref[...]
        b2 = b2_ref[...]
        # Static unroll over independent row sub-blocks: sub-block k's tanh/bias
        # (VPU/EUP) overlaps sub-block k+1's matmul (MXU).
        for s in range(nsub):
            r0 = s * sub_rows
            x = x_ref[pl.ds(r0, sub_rows), :].astype(jnp.bfloat16)
            h = jnp.dot(x, w1, preferred_element_type=jnp.float32)
            h = jnp.tanh(h + b1)                      # f32 bias + tanh epilogue
            out = jnp.dot(h.astype(jnp.bfloat16), w2,
                          preferred_element_type=jnp.float32)
            o_ref[pl.ds(r0, sub_rows), :] = (out + b2).astype(o_ref.dtype)
    return _head_kernel


def roberta_classification_head(features, w1, b1, w2, b2, *, batch_tile=512):
    """features: [B, T, D]. w1: [D, H], b1: [H], w2: [H, C], b2: [C].

    Returns logits [B, C] (float32). Dropout is treated as identity (eval mode).
    Weights are stored pre-transposed ([in, out]) vs nn.Linear's [out, in].
    """
    B, T, D = features.shape
    H = w1.shape[1]
    C = w2.shape[1]
    Cp = _round_up(max(C, 1), 128)                   # lane-dense out_proj width

    # ---- parameter prep (tiny, once per trace) ------------------------------
    w1b = w1.astype(jnp.bfloat16)
    b1_2d = b1.astype(jnp.float32).reshape(1, H)
    w2p = jnp.zeros((H, Cp), dtype=jnp.bfloat16).at[:, :C].set(
        w2.astype(jnp.bfloat16))
    b2p = jnp.zeros((1, Cp), dtype=jnp.float32).at[:, :C].set(
        b2.astype(jnp.float32).reshape(1, C))

    # ---- fused CLS slice -----------------------------------------------------
    # Columns [0, D) of the (B, T*D) view are features[:, 0, :].  The lane-
    # blocked read needs D % 128 == 0; otherwise fall back to a wrapper gather
    # (then stored bf16 so the kernel-facing stream is already halved).
    if D % 128 == 0:
        x_in = features.reshape(B, T * D)            # contiguous -> no HBM copy
    else:
        x_in = features[:, 0, :].astype(jnp.bfloat16)

    # ---- batch tiling --------------------------------------------------------
    tb = _pick_tb(B, batch_tile)
    grid = (pl.cdiv(B, tb),)
    nsub = _pick_nsub(tb)
    sub_rows = tb // nsub
    # NOTE: if B % tb != 0 the final block reads undefined rows past B; they
    # only influence output rows >= B, which are dropped on writeback.

    x_itemsize = jnp.dtype(x_in.dtype).itemsize
    # VMEM budget: x/out tiles double-buffered, weights single-buffered.
    vmem_need = (2 * tb * D * x_itemsize
                 + D * H * 2 + H * Cp * 2
                 + 4 * (H + Cp)
                 + 2 * tb * Cp * 4)
    vmem_limit = int(min(max(2 * vmem_need + (4 << 20), 16 << 20), 64 << 20))

    cost = pl.CostEstimate(
        flops=2 * B * D * H + 2 * B * H * Cp,
        transcendentals=B * H,
        bytes_accessed=(B * D * x_itemsize           # CLS rows of features
                        + D * H * 2 + H * Cp * 2     # bf16 weights
                        + 4 * (H + Cp)               # biases
                        + B * Cp * 4),               # output
    )

    resident = dict(pipeline_mode=pl.Buffered(1))    # constant-index operands

    out = pl.pallas_call(
        _make_head_kernel(nsub, sub_rows),
        out_shape=jax.ShapeDtypeStruct((B, Cp), jnp.float32),
        grid=grid,
        in_specs=[
            pl.BlockSpec((tb, D), lambda i: (i, 0)),             # per-tile CLS rows
            pl.BlockSpec((D, H), lambda i: (0, 0), **resident),  # W1 resident
            pl.BlockSpec((1, H), lambda i: (0, 0), **resident),  # b1 resident
            pl.BlockSpec((H, Cp), lambda i: (0, 0), **resident), # W2 (padded)
            pl.BlockSpec((1, Cp), lambda i: (0, 0), **resident), # b2 (padded)
        ],
        out_specs=pl.BlockSpec((tb, Cp), lambda i: (i, 0)),
        compiler_params=pltpu.CompilerParams(
            dimension_semantics=("parallel",),       # pipelining + v7x megacore
            vmem_limit_bytes=vmem_limit),
        cost_estimate=cost,
    )(x_in, w1b, b1_2d, w2p, b2p)

    return out[:, :C]


def _reference(features, w1, b1, w2, b2):
    # Mirrors the kernel's bf16 operand storage with f32 accumulation.
    x = features[:, 0, :].astype(jnp.bfloat16).astype(jnp.float32)
    w1f = w1.astype(jnp.bfloat16).astype(jnp.float32)
    w2f = w2.astype(jnp.bfloat16).astype(jnp.float32)
    h = jnp.tanh(x @ w1f + b1.astype(jnp.float32))
    h = h.astype(jnp.bfloat16).astype(jnp.float32)
    return h @ w2f + b2.astype(jnp.float32)


def _run_case(key, B, T, D, H, C):
    k_feat, k_w1, k_b1, k_w2, k_b2 = jax.random.split(key, 5)
    features = jax.random.normal(k_feat, (B, T, D), dtype=jnp.float32)
    w1 = jax.random.normal(k_w1, (D, H), dtype=jnp.float32) * 0.05
    b1 = jax.random.normal(k_b1, (H,), dtype=jnp.float32) * 0.05
    w2 = jax.random.normal(k_w2, (H, C), dtype=jnp.float32) * 0.05
    b2 = jax.random.normal(k_b2, (C,), dtype=jnp.float32) * 0.05

    head = jax.jit(roberta_classification_head)
    out = jax.block_until_ready(head(features, w1, b1, w2, b2))
    ref = _reference(features, w1, b1, w2, b2)
    assert out.shape == (B, C)
    assert jnp.allclose(out, ref, atol=2e-3, rtol=2e-3), \
        f"mismatch vs reference (B={B})"


if __name__ == "__main__":
    # Shapes consistent with the module: input_dim=128, inner_dim=128, classes=4.
    key = jax.random.PRNGKey(0)
    k0, k1 = jax.random.split(key)

    # Small spec-like case: batch=2, seq=8 (grid collapses to one full block).
    _run_case(k0, B=2, T=8, D=128, H=128, C=4)
    # Multi-step grid + in-kernel sub-blocks + ragged edge (tb=16, grid=3, nsub=2).
    _run_case(k1, B=36, T=8, D=128, H=128, C=4)

    print("KERNEL_OK")
</pallas_src>

<mosaic_0001>
module attributes {stable_mosaic.version = 11 : i64} {
  func.func @_head_kernel(%arg0: i32, %arg1: memref<2x128xf32, #tpu.memory_space<vmem>>, %arg2: memref<128x128xbf16, #tpu.memory_space<vmem>>, %arg3: memref<1x128xf32, #tpu.memory_space<vmem>>, %arg4: memref<128x128xbf16, #tpu.memory_space<vmem>>, %arg5: memref<1x128xf32, #tpu.memory_space<vmem>>, %arg6: memref<2x128xf32, #tpu.memory_space<vmem>>) attributes {dimension_semantics = [#tpu.dimension_semantics<parallel>], iteration_bounds = array<i64: 1>, scalar_prefetch = 0 : i64, scratch_operands = 0 : i64, tpu.core_type = #tpu.core_type<tc>, window_params = [{transform_indices = @transform_0, window_bounds = array<i64: 2, 128>}, {pipeline_mode = #tpu.pipeline_mode<synchronous>, transform_indices = @transform_1, window_bounds = array<i64: 128, 128>}, {pipeline_mode = #tpu.pipeline_mode<synchronous>, transform_indices = @transform_2, window_bounds = array<i64: 1, 128>}, {pipeline_mode = #tpu.pipeline_mode<synchronous>, transform_indices = @transform_3, window_bounds = array<i64: 128, 128>}, {pipeline_mode = #tpu.pipeline_mode<synchronous>, transform_indices = @transform_4, window_bounds = array<i64: 1, 128>}, {transform_indices = @transform_5, window_bounds = array<i64: 2, 128>}]} {
    %c0 = arith.constant 0 : index
    %c0_0 = arith.constant 0 : index
    %0 = vector.load %arg2[%c0, %c0_0] : memref<128x128xbf16, #tpu.memory_space<vmem>>, vector<128x128xbf16>
    %c0_1 = arith.constant 0 : index
    %c0_2 = arith.constant 0 : index
    %1 = vector.load %arg3[%c0_1, %c0_2] : memref<1x128xf32, #tpu.memory_space<vmem>>, vector<1x128xf32>
    %c0_3 = arith.constant 0 : index
    %c0_4 = arith.constant 0 : index
    %2 = vector.load %arg4[%c0_3, %c0_4] : memref<128x128xbf16, #tpu.memory_space<vmem>>, vector<128x128xbf16>
    %c0_5 = arith.constant 0 : index
    %c0_6 = arith.constant 0 : index
    %3 = vector.load %arg5[%c0_5, %c0_6] : memref<1x128xf32, #tpu.memory_space<vmem>>, vector<1x128xf32>
    %c0_7 = arith.constant 0 : index
    %c0_8 = arith.constant 0 : index
    %4 = vector.load %arg1[%c0_7, %c0_8] : memref<2x128xf32, #tpu.memory_space<vmem>>, vector<2x128xf32>
    %5 = arith.truncf %4 : vector<2x128xf32> to vector<2x128xbf16>
    %cst = arith.constant dense<0.000000e+00> : vector<2x128xf32>
    %6 = tpu.matmul %5, %0, %cst {dimension_numbers = #tpu.dot_dimension_numbers<[1], [0], [0], [1], [0, 0, 1, 1], [], []>} : vector<2x128xbf16>, vector<128x128xbf16>, vector<2x128xf32> -> vector<2x128xf32>
    %7 = vector.broadcast %1 : vector<1x128xf32> to vector<2x128xf32>
    %8 = arith.addf %6, %7 : vector<2x128xf32>
    %9 = math.tanh %8 : vector<2x128xf32>
    %10 = arith.truncf %9 : vector<2x128xf32> to vector<2x128xbf16>
    %cst_9 = arith.constant dense<0.000000e+00> : vector<2x128xf32>
    %11 = tpu.matmul %10, %2, %cst_9 {dimension_numbers = #tpu.dot_dimension_numbers<[1], [0], [0], [1], [0, 0, 1, 1], [], []>} : vector<2x128xbf16>, vector<128x128xbf16>, vector<2x128xf32> -> vector<2x128xf32>
    %12 = vector.broadcast %3 : vector<1x128xf32> to vector<2x128xf32>
    %13 = arith.addf %11, %12 : vector<2x128xf32>
    %c0_10 = arith.constant 0 : index
    %c0_11 = arith.constant 0 : index
    %14 = vector.load %arg6[%c0_10, %c0_11] : memref<2x128xf32, #tpu.memory_space<vmem>>, vector<2x128xf32>
    tpu.vector_store %arg6[%c0_10, %c0_11], %13 {strides = array<i32>} : memref<2x128xf32, #tpu.memory_space<vmem>>, vector<2x128xf32>,
    return
  }
  func.func @transform_0(%arg0: i32) -> (i32, i32) {
    %c0_i32 = arith.constant 0 : i32
    %c0_i32_0 = arith.constant 0 : i32
    return %arg0, %c0_i32 : i32, i32
  }
  func.func @transform_1(%arg0: i32) -> (i32, i32) {
    %c0_i32 = arith.constant 0 : i32
    %c0_i32_0 = arith.constant 0 : i32
    %c0_i32_1 = arith.constant 0 : i32
    return %c0_i32, %c0_i32_0 : i32, i32
  }
  func.func @transform_2(%arg0: i32) -> (i32, i32) {
    %c0_i32 = arith.constant 0 : i32
    %c0_i32_0 = arith.constant 0 : i32
    %c0_i32_1 = arith.constant 0 : i32
    return %c0_i32, %c0_i32_0 : i32, i32
  }
  func.func @transform_3(%arg0: i32) -> (i32, i32) {
    %c0_i32 = arith.constant 0 : i32
    %c0_i32_0 = arith.constant 0 : i32
    %c0_i32_1 = arith.constant 0 : i32
    return %c0_i32, %c0_i32_0 : i32, i32
  }
  func.func @transform_4(%arg0: i32) -> (i32, i32) {
    %c0_i32 = arith.constant 0 : i32
    %c0_i32_0 = arith.constant 0 : i32
    %c0_i32_1 = arith.constant 0 : i32
    return %c0_i32, %c0_i32_0 : i32, i32
  }
  func.func @transform_5(%arg0: i32) -> (i32, i32) {
    %c0_i32 = arith.constant 0 : i32
    %c0_i32_0 = arith.constant 0 : i32
    return %arg0, %c0_i32 : i32, i32
  }
}

</mosaic_0001>

<llo_original>
// kernel: roberta_classification_head.1
$region0: #{roberta_classification_head.1}
  #allocation0 [shape = 'u32[]', space=smem, size = 0x4, offset = 0x4, fixed_abs, tag = 'smem constant byte address 0x4 - core index']
  #allocation1 [shape = 'u32[144,128]{1,0:T(1,128)}', space=vmem, size = 0x12000, scoped, tag = 'internal scratch']
  %s0 = inlined_call_operand.vmem [shape: f32[2,1024], index: 0, kind: input, shape index: {}]
  %s1 = inlined_call_operand.vmem [shape: bf16[128,128], index: 1, kind: input, shape index: {}]
  %s2 = inlined_call_operand.vmem [shape: f32[1,128], index: 2, kind: input, shape index: {}]
  %s3 = inlined_call_operand.vmem [shape: bf16[128,128], index: 3, kind: input, shape index: {}]
  %s4 = inlined_call_operand.vmem [shape: f32[1,128], index: 4, kind: input, shape index: {}]
  %s5 = inlined_call_operand.hbm [shape: f32[2,128], index: 5, kind: output, shape index: {}]
  %s6 = sld [smem:[#allocation0]]
  $region30: #{roberta_classification_head.1} parent=0
    _
  %s8 = ssub.s32 1, %s6
  %s9 = scalar_select 0, %s8, %s6
  $region1: #{roberta_classification_head.1} parent=0
    #allocation2 [shape = 'u8[1024]{0}', space=vmem, size = 0x400, scoped, tag = 'output window, operand 0, single buffered']
    #allocation3 [shape = 's32[1]{0}', space=sflag, size = 0x4, scoped, tag = 'scoped memory for roberta_classification_head.1']
    %10 = vsyncpa [#allocation3], 0
    // Predicated region
    $region2: #{roberta_classification_head.1} parent=1 // pred_check
      _
    $region3: #{roberta_classification_head.1} parent=1 // pred_check_branch
      %12 = sbr.rel (0) target = $region5
    $region4: #{roberta_classification_head.1} parent=1 // pred_region
      _
    $region5: #{roberta_classification_head.1} parent=1 // pred_fallthru
      _
    // Predicated region
    $region6: #{roberta_classification_head.1} parent=1 // pred_check
      _
    $region7: #{roberta_classification_head.1} parent=1 // pred_check_branch
      %14 = sbr.rel (0) target = $region9
    $region8: #{roberta_classification_head.1} parent=1 // pred_region
      _
    $region9: #{roberta_classification_head.1} parent=1 // pred_fallthru
      _
    // Predicated region
    $region10: #{roberta_classification_head.1} parent=1 // pred_check
      _
    $region11: #{roberta_classification_head.1} parent=1 // pred_check_branch
      %16 = sbr.rel (0) target = $region13
    $region12: #{roberta_classification_head.1} parent=1 // pred_region
      _
    $region13: #{roberta_classification_head.1} parent=1 // pred_fallthru
      _
    // Predicated region
    $region14: #{roberta_classification_head.1} parent=1 // pred_check
      _
    $region15: #{roberta_classification_head.1} parent=1 // pred_check_branch
      %18 = sbr.rel (0) target = $region17
    $region16: #{roberta_classification_head.1} parent=1 // pred_region
      _
    $region17: #{roberta_classification_head.1} parent=1 // pred_fallthru
      _
    // Predicated region
    $region18: #{roberta_classification_head.1} parent=1 // pred_check
      _
    $region19: #{roberta_classification_head.1} parent=1 // pred_check_branch
      %20 = sbr.rel (0) target = $region21
    $region20: #{roberta_classification_head.1} parent=1 // pred_region
      _
    $region21: #{roberta_classification_head.1} parent=1 // pred_fallthru
      _
    %v22 = vld [vmem:[%s1] sm:$0xf]
    %v23 = vld [vmem:[%s1 + $0x4] sm:$0xf]
    %v24 = vld [vmem:[%s1 + $0x8] sm:$0xf]
    %v25 = vld [vmem:[%s1 + $0xc] sm:$0xf]
    %v26 = vld [vmem:[%s1 + $0x10] sm:$0xf]
    %v27 = vld [vmem:[%s1 + $0x14] sm:$0xf]
    %v28 = vld [vmem:[%s1 + $0x18] sm:$0xf]
    %v29 = vld [vmem:[%s1 + $0x1c] sm:$0xf]
    %v30 = vld [vmem:[%s1 + $0x20] sm:$0xf]
    %v31 = vld [vmem:[%s1 + $0x24] sm:$0xf]
    %v32 = vld [vmem:[%s1 + $0x28] sm:$0xf]
    %v33 = vld [vmem:[%s1 + $0x2c] sm:$0xf]
    %v34 = vld [vmem:[%s1 + $0x30] sm:$0xf]
    %v35 = vld [vmem:[%s1 + $0x34] sm:$0xf]
    %v36 = vld [vmem:[%s1 + $0x38] sm:$0xf]
    %v37 = vld [vmem:[%s1 + $0x3c] sm:$0xf]
    %v38 = vld [vmem:[%s2] sm:$0x1]
    %v39 = vld [vmem:[%s3] sm:$0xf]
    %v40 = vld [vmem:[%s3 + $0x4] sm:$0xf]
    %v41 = vld [vmem:[%s3 + $0x8] sm:$0xf]
    %v42 = vld [vmem:[%s3 + $0xc] sm:$0xf]
    %v43 = vld [vmem:[%s3 + $0x10] sm:$0xf]
    %v44 = vld [vmem:[%s3 + $0x14] sm:$0xf]
    %v45 = vld [vmem:[%s3 + $0x18] sm:$0xf]
    %v46 = vld [vmem:[%s3 + $0x1c] sm:$0xf]
    %v47 = vld [vmem:[%s3 + $0x20] sm:$0xf]
    %v48 = vld [vmem:[%s3 + $0x24] sm:$0xf]
    %v49 = vld [vmem:[%s3 + $0x28] sm:$0xf]
    %v50 = vld [vmem:[%s3 + $0x2c] sm:$0xf]
    %v51 = vld [vmem:[%s3 + $0x30] sm:$0xf]
    %v52 = vld [vmem:[%s3 + $0x34] sm:$0xf]
    %v53 = vld [vmem:[%s3 + $0x38] sm:$0xf]
    %v54 = vld [vmem:[%s3 + $0x3c] sm:$0xf]
    %v55 = vld [vmem:[%s4] sm:$0x1]
    %v56 = vld [vmem:[%s0] sm:$0x3]
    %v57 = vpack.c.bf16 %v56, %v56
    %v59 = vlaneseq
    %v60 = vshrl.u32 %v59, 7
    %v61 = vsub.s32 0, %v60
    %v62 = vrot.slane %v38, %v61
    %v80 = vunpack.c.l.b16 %v22
    %v81 = vunpack.c.l.b16 %v23
    %v82 = vunpack.c.l.b16 %v24
    %v83 = vunpack.c.l.b16 %v25
    %v84 = vunpack.c.l.b16 %v26
    %v85 = vunpack.c.l.b16 %v27
    %v86 = vunpack.c.l.b16 %v28
    %v87 = vunpack.c.l.b16 %v29
    %v88 = vunpack.c.l.b16 %v30
    %v89 = vunpack.c.l.b16 %v31
    %v90 = vunpack.c.l.b16 %v32
    %v91 = vunpack.c.l.b16 %v33
    %v92 = vunpack.c.l.b16 %v34
    %v93 = vunpack.c.l.b16 %v35
    %v94 = vunpack.c.l.b16 %v36
    %v95 = vunpack.c.l.b16 %v37
    %v96 = vpack.c.b16 %v81, %v80
    %v97 = vpack.c.b16 %v83, %v82
    %v98 = vpack.c.b16 %v85, %v84
    %v99 = vpack.c.b16 %v87, %v86
    %v100 = vpack.c.b16 %v89, %v88
    %v101 = vpack.c.b16 %v91, %v90
    %v102 = vpack.c.b16 %v93, %v92
    %v103 = vpack.c.b16 %v95, %v94
    %112 = vmatprep.subr.bf16.mxu0 0
    %113 = vmatpush1.bf16.msra.mxu0 %v103
    %114 = vmatprep.subr.bf16.mxu0 0
    %115 = vmatpush1.bf16.msra.mxu0 %v102
    %116 = vmatprep.subr.bf16.mxu0 0
    %117 = vmatpush1.bf16.msra.mxu0 %v101
    %118 = vmatprep.subr.bf16.mxu0 0
    %119 = vmatpush1.bf16.msra.mxu0 %v100
    %120 = vmatprep.subr.bf16.mxu0 0
    %121 = vmatpush1.bf16.msra.mxu0 %v99
    %122 = vmatprep.subr.bf16.mxu0 0
    %123 = vmatpush1.bf16.msra.mxu0 %v98
    %124 = vmatprep.subr.bf16.mxu0 0
    %125 = vmatpush1.bf16.msra.mxu0 %v97
    %126 = vmatprep.subr.bf16.mxu0 0
    %127 = vmatpush1.bf16.msra.mxu0 %v96
    %128 = vmatprep.subr.bf16.mxu0 0
    %129 = vmatpush2.bf16.msra.mxu0 0
    %130 = vmatprep.subr.bf16.mxu0 0
    %131 = vmatpush2.bf16.msra.mxu0 0
    %132 = vmatprep.subr.bf16.mxu0 0
    %133 = vmatpush2.bf16.msra.mxu0 0
    %134 = vmatprep.subr.bf16.mxu0 0
    %135 = vmatpush2.bf16.msra.mxu0 0
    %136 = vmatprep.subr.bf16.mxu0 0
    %137 = vmatpush2.bf16.msra.mxu0 0
    %138 = vmatprep.subr.bf16.mxu0 0
    %139 = vmatpush2.bf16.msra.mxu0 0
    %140 = vmatprep.subr.bf16.mxu0 0
    %141 = vmatpush2.bf16.msra.mxu0 0
    %142 = vmatprep.subr.bf16.mxu0 0
    %143 = vmatpush2.bf16.msra.mxu0 0
    %144 = vmatprep.mubr.bf16.mxu0 0
    %145 = vmatmul.mubr.bf16.gmra.mxu0 %v57
    %v146 = vpop.f32.mrf.mxu0
    %v147 = vadd.f32 %v62, %v146
    %v148 = vpop.f32.mrf.mxu0
    %v149 = vpop.f32.mrf.mxu0
    %v150 = vpop.f32.mrf.mxu0
    %151 = vdwg.mxu0
    %v152 = vtanh.pop %v147
    %v153 = vpack.c.bf16 %v152, %v152
    %v155 = vlaneseq
    %v156 = vshrl.u32 %v155, 7
    %v157 = vsub.s32 0, %v156
    %v158 = vrot.slane %v55, %v157
    %v176 = vunpack.c.l.b16 %v39
    %v177 = vunpack.c.l.b16 %v40
    %v178 = vunpack.c.l.b16 %v41
    %v179 = vunpack.c.l.b16 %v42
    %v180 = vunpack.c.l.b16 %v43
    %v181 = vunpack.c.l.b16 %v44
    %v182 = vunpack.c.l.b16 %v45
    %v183 = vunpack.c.l.b16 %v46
    %v184 = vunpack.c.l.b16 %v47
    %v185 = vunpack.c.l.b16 %v48
    %v186 = vunpack.c.l.b16 %v49
    %v187 = vunpack.c.l.b16 %v50
    %v188 = vunpack.c.l.b16 %v51
    %v189 = vunpack.c.l.b16 %v52
    %v190 = vunpack.c.l.b16 %v53
    %v191 = vunpack.c.l.b16 %v54
    %v192 = vpack.c.b16 %v177, %v176
    %v193 = vpack.c.b16 %v179, %v178
    %v194 = vpack.c.b16 %v181, %v180
    %v195 = vpack.c.b16 %v183, %v182
    %v196 = vpack.c.b16 %v185, %v184
    %v197 = vpack.c.b16 %v187, %v186
    %v198 = vpack.c.b16 %v189, %v188
    %v199 = vpack.c.b16 %v191, %v190
    %208 = vmatprep.subr.bf16.mxu0 0
    %209 = vmatpush1.bf16.msra.mxu0 %v199
    %210 = vmatprep.subr.bf16.mxu0 0
    %211 = vmatpush1.bf16.msra.mxu0 %v198
    %212 = vmatprep.subr.bf16.mxu0 0
    %213 = vmatpush1.bf16.msra.mxu0 %v197
    %214 = vmatprep.subr.bf16.mxu0 0
    %215 = vmatpush1.bf16.msra.mxu0 %v196
    %216 = vmatprep.subr.bf16.mxu0 0
    %217 = vmatpush1.bf16.msra.mxu0 %v195
    %218 = vmatprep.subr.bf16.mxu0 0
    %219 = vmatpush1.bf16.msra.mxu0 %v194
    %220 = vmatprep.subr.bf16.mxu0 0
    %221 = vmatpush1.bf16.msra.mxu0 %v193
    %222 = vmatprep.subr.bf16.mxu0 0
    %223 = vmatpush1.bf16.msra.mxu0 %v192
    %224 = vmatprep.subr.bf16.mxu0 0
    %225 = vmatpush2.bf16.msra.mxu0 0
    %226 = vmatprep.subr.bf16.mxu0 0
    %227 = vmatpush2.bf16.msra.mxu0 0
    %228 = vmatprep.subr.bf16.mxu0 0
    %229 = vmatpush2.bf16.msra.mxu0 0
    %230 = vmatprep.subr.bf16.mxu0 0
    %231 = vmatpush2.bf16.msra.mxu0 0
    %232 = vmatprep.subr.bf16.mxu0 0
    %233 = vmatpush2.bf16.msra.mxu0 0
    %234 = vmatprep.subr.bf16.mxu0 0
    %235 = vmatpush2.bf16.msra.mxu0 0
    %236 = vmatprep.subr.bf16.mxu0 0
    %237 = vmatpush2.bf16.msra.mxu0 0
    %238 = vmatprep.subr.bf16.mxu0 0
    %239 = vmatpush2.bf16.msra.mxu0 0
    %240 = vmatprep.mubr.bf16.mxu0 0
    %241 = vmatmul.mubr.bf16.gmra.mxu0 %v153
    %v242 = vpop.f32.mrf.mxu0
    %v243 = vadd.f32 %v158, %v242
    %v244 = vpop.f32.mrf.mxu0
    %v245 = vpop.f32.mrf.mxu0
    %v246 = vpop.f32.mrf.mxu0
    %247 = vdwg.mxu0
    %248 = vst [vmem:[#allocation2] sm:$0x3] %v243
    // Predicated region
    $region22: #{roberta_classification_head.1} parent=1 // pred_check
      _
    $region23: #{roberta_classification_head.1} parent=1 // pred_check_branch
      %250 = sbr.rel (0) target = $region25
    $region24: #{roberta_classification_head.1} parent=1 // pred_region
      %s252 = ssub.s32 32, 32
      %253 = vsyncadd [#allocation3], %s252
      %s255 = sshll.u32 [#allocation2], 4
      %s256 = int_to_ptr.vmem [resolvable:$true] %s255
      %258 = dma.vmem_to_hbm [thread:$0]  %s256, 32, %s5, [#allocation3]
    $region25: #{roberta_classification_head.1} parent=1 // pred_fallthru
      _
    // Predicated region
    $region26: #{roberta_classification_head.1} parent=1 // pred_check
      _
    $region27: #{roberta_classification_head.1} parent=1 // pred_check_branch
      %260 = sbr.rel (0) target = $region29
    $region28: #{roberta_classification_head.1} parent=1 // pred_region
      %261 = dma.done [#allocation3], 32
    $region29: #{roberta_classification_head.1} parent=1 // pred_fallthru
      _
    %262 = vsyncpa [#allocation3], 1

</llo_original>
